<compile_context>
chip_gen: v5e
topology: v5e:2x2
jax: 0.10.0
libtpu: 0.0.40
codegen_flags: <defaults>
</compile_context>

<pallas_src>
import jax
import jax.numpy as jnp
from jax.experimental import pallas as pl
from jax.experimental.pallas import tpu as pltpu


def _mish_kernel(x_ref, o_ref):
    x = x_ref[...]
    # widen transiently in-registers only if the input is narrower than f32
    xf = x if x.dtype == jnp.float32 else x.astype(jnp.float32)

    # tanh(softplus(x)) == n / (n + 2)  with  n = e*(e+2), e = exp(x).
    # Clamp x at 20: for x > 20 the ratio is 1.0 to f32 precision (mish(x)=x),
    # and clamping prevents exp overflow (mirrors PyTorch's softplus threshold).
    e = jnp.exp(jnp.minimum(xf, 20.0))
    n = e * (e + 2.0)
    d = n + 2.0

    # approximate reciprocal on the EUP slot, refined to ~f32 accuracy with two
    # Newton steps on the VPU (which has plenty of slack in this mem-bound kernel)
    r = pl.reciprocal(d, approx=True)
    r = r * (2.0 - d * r)
    r = r * (2.0 - d * r)

    y = xf * n * r
    o_ref[...] = y if y.dtype == o_ref.dtype else y.astype(o_ref.dtype)


def _choose_layout(n):
    """Pick the widest lane dim that divides n (no padding); else pad to 128."""
    for lanes in (1024, 512, 256, 128):
        if n % lanes == 0:
            return lanes, 0
    lanes = 128
    pad = (-n) % lanes
    return lanes, pad


def mish(x, *, target_block_bytes=2 * 1024 * 1024):
    """Apply Mish elementwise to an array of any shape (NCHW expected)."""
    orig_shape = x.shape
    dtype = x.dtype
    n = x.size
    if n == 0:
        return x

    lanes, pad = _choose_layout(n)
    xf = x.reshape(-1)
    if pad:
        # mish(0) == 0, so zero padding of the tail is harmless
        xf = jnp.pad(xf, (0, pad))
    rows = (n + pad) // lanes
    x2d = xf.reshape(rows, lanes)

    dsize = jnp.dtype(dtype).itemsize
    block_rows = max(8, (target_block_bytes // (lanes * dsize)) // 8 * 8)
    if block_rows > rows:
        # a full-extent block is always legal regardless of (8,128) divisibility
        block_rows = rows

    grid = (pl.cdiv(rows, block_rows),)  # ragged last block masked by Pallas

    out2d = pl.pallas_call(
        _mish_kernel,
        out_shape=jax.ShapeDtypeStruct((rows, lanes), dtype),
        grid_spec=pltpu.PrefetchScalarGridSpec(
            num_scalar_prefetch=0,
            grid=grid,
            in_specs=[pl.BlockSpec((block_rows, lanes), lambda i: (i, 0))],
            out_specs=pl.BlockSpec((block_rows, lanes), lambda i: (i, 0)),
        ),
        compiler_params=pltpu.CompilerParams(
            dimension_semantics=("parallel",)),
    )(x2d)

    out = out2d.reshape(-1)
    if pad:
        out = out[:n]
    return out.reshape(orig_shape)


def mish_ref(x):
    # numerically stable reference: softplus + tanh (matches torch to fp precision)
    xf = x.astype(jnp.float32)
    sp = jnp.log1p(jnp.exp(-jnp.abs(xf))) + jnp.maximum(xf, 0.0)
    return (xf * jnp.tanh(sp)).astype(x.dtype)


# TODO(synk): the rest of MRGblock (dilated/grouped Conv2d, BatchNorm2d,
# SpatialAttention, ConvGRU) maps to XLA convolutions, not a clean single
# Pallas kernel; only the module family's elementwise activation is done here.

if __name__ == "__main__":
    key = jax.random.PRNGKey(0)

    # main case: lane-aligned NCHW activation (no padding path)
    x1 = jax.random.normal(key, (2, 4, 16, 16), dtype=jnp.float32) * 3.0
    y1 = jax.block_until_ready(mish(x1))
    assert y1.shape == x1.shape and y1.dtype == x1.dtype
    assert jnp.allclose(y1, mish_ref(x1), atol=1e-5, rtol=1e-5)

    # ragged case: element count not divisible by 128 (exercises pad + slice tail)
    x2 = jax.random.normal(jax.random.PRNGKey(1), (3, 5, 7, 11), dtype=jnp.float32) * 3.0
    y2 = jax.block_until_ready(mish(x2))
    assert y2.shape == x2.shape
    assert jnp.allclose(y2, mish_ref(x2), atol=1e-5, rtol=1e-5)

    # multi-step grid with a partial last block (small block size forces 2 steps)
    x3 = jax.random.normal(jax.random.PRNGKey(2), (2, 5, 16, 16), dtype=jnp.float32) * 3.0
    y3 = jax.block_until_ready(mish(x3, target_block_bytes=8 * 256 * 4))
    assert y3.shape == x3.shape
    assert jnp.allclose(y3, mish_ref(x3), atol=1e-5, rtol=1e-5)

    print("KERNEL_OK")
</pallas_src>

<mosaic_0001>
module attributes {stable_mosaic.version = 11 : i64} {
  func.func @_mish_kernel(%arg0: i32, %arg1: memref<2x1024xf32, #tpu.memory_space<vmem>>, %arg2: memref<2x1024xf32, #tpu.memory_space<vmem>>) attributes {dimension_semantics = [#tpu.dimension_semantics<parallel>], iteration_bounds = array<i64: 1>, scalar_prefetch = 0 : i64, scratch_operands = 0 : i64, tpu.core_type = #tpu.core_type<tc>, window_params = [{transform_indices = @transform_0, window_bounds = array<i64: 2, 1024>}, {transform_indices = @transform_1, window_bounds = array<i64: 2, 1024>}]} {
    %c0 = arith.constant 0 : index
    %c0_0 = arith.constant 0 : index
    %0 = vector.load %arg1[%c0, %c0_0] : memref<2x1024xf32, #tpu.memory_space<vmem>>, vector<2x1024xf32>
    %cst = arith.constant 2.000000e+01 : f32
    %1 = vector.broadcast %cst : f32 to vector<2x1024xf32>
    %2 = arith.minimumf %0, %1 : vector<2x1024xf32>
    %3 = math.exp %2 : vector<2x1024xf32>
    %cst_1 = arith.constant 2.000000e+00 : f32
    %4 = vector.broadcast %cst_1 : f32 to vector<2x1024xf32>
    %5 = arith.addf %3, %4 : vector<2x1024xf32>
    %6 = arith.mulf %3, %5 : vector<2x1024xf32>
    %cst_2 = arith.constant 2.000000e+00 : f32
    %7 = vector.broadcast %cst_2 : f32 to vector<2x1024xf32>
    %8 = arith.addf %6, %7 : vector<2x1024xf32>
    %9 = tpu.reciprocal %8 {approx = true} : vector<2x1024xf32> -> vector<2x1024xf32>
    %10 = arith.mulf %8, %9 : vector<2x1024xf32>
    %cst_3 = arith.constant 2.000000e+00 : f32
    %11 = vector.broadcast %cst_3 : f32 to vector<2x1024xf32>
    %12 = arith.subf %11, %10 : vector<2x1024xf32>
    %13 = arith.mulf %9, %12 : vector<2x1024xf32>
    %14 = arith.mulf %8, %13 : vector<2x1024xf32>
    %cst_4 = arith.constant 2.000000e+00 : f32
    %15 = vector.broadcast %cst_4 : f32 to vector<2x1024xf32>
    %16 = arith.subf %15, %14 : vector<2x1024xf32>
    %17 = arith.mulf %13, %16 : vector<2x1024xf32>
    %18 = arith.mulf %0, %6 : vector<2x1024xf32>
    %19 = arith.mulf %18, %17 : vector<2x1024xf32>
    %c0_5 = arith.constant 0 : index
    %c0_6 = arith.constant 0 : index
    %20 = vector.load %arg2[%c0_5, %c0_6] : memref<2x1024xf32, #tpu.memory_space<vmem>>, vector<2x1024xf32>
    tpu.vector_store %arg2[%c0_5, %c0_6], %19 {strides = array<i32>} : memref<2x1024xf32, #tpu.memory_space<vmem>>, vector<2x1024xf32>,
    return
  }
  func.func @transform_0(%arg0: i32) -> (i32, i32) {
    %c0_i32 = arith.constant 0 : i32
    %c0_i32_0 = arith.constant 0 : i32
    return %arg0, %c0_i32 : i32, i32
  }
  func.func @transform_1(%arg0: i32) -> (i32, i32) {
    %c0_i32 = arith.constant 0 : i32
    %c0_i32_0 = arith.constant 0 : i32
    return %arg0, %c0_i32 : i32, i32
  }
}

</mosaic_0001>

<llo_original>
// kernel: tpu_custom_call.1
$region0: #{tpu_custom_call.1}
  #allocation0 [shape = 'u32[]', space=smem, size = 0x4, offset = 0x4, fixed_abs, tag = 'smem constant byte address 0x4 - core index']
  #allocation1 [shape = 'u32[72,128]{1,0:T(1,128)}', space=vmem, size = 0x9000, scoped, tag = 'internal scratch']
  %s0 = inlined_call_operand.hbm [shape: f32[2,1024], index: 0, kind: input, shape index: {}]
  %s1 = inlined_call_operand.hbm [shape: f32[2,1024], index: 1, kind: output, shape index: {}]
  %s2 = sld [smem:[#allocation0]]
  $region18: #{tpu_custom_call.1} parent=0
    _
  %s4 = ssub.s32 1, %s2
  %s5 = scalar_select 0, %s4, %s2
  $region1: #{tpu_custom_call.1} parent=0
    #allocation2 [shape = 'u8[8192]{0}', space=vmem, size = 0x2000, scoped, tag = 'input window, operand 0, single buffered']
    #allocation3 [shape = 's32[1]{0}', space=sflag, size = 0x4, scoped, tag = 'scoped memory for tpu_custom_call.1']
    #allocation4 [shape = 's32[1]{0}', space=sflag, size = 0x4, scoped, tag = 'scoped memory for tpu_custom_call.1']
    #allocation5 [shape = 'u8[8192]{0}', space=vmem, size = 0x2000, scoped, tag = 'output window, operand 0, single buffered']
    %6 = vsyncpa [#allocation3], 0
    %7 = vsyncpa [#allocation4], 0
    // Predicated region
    $region2: #{tpu_custom_call.1} parent=1 // pred_check
      _
    $region3: #{tpu_custom_call.1} parent=1 // pred_check_branch
      %9 = sbr.rel (0) target = $region5
    $region4: #{tpu_custom_call.1} parent=1 // pred_region
      %11 = vsyncadd [#allocation3], 0
      %s13 = sshll.u32 %s0, 4
      %s14 = int_to_ptr.hbm [resolvable:$true] %s13
      %s15 = sshll.u32 [#allocation2], 4
      %s16 = int_to_ptr.vmem [resolvable:$true] %s15
      %18 = dma.hbm_to_vmem [thread:$0]  %s14, 256, %s16, [#allocation3]
    $region5: #{tpu_custom_call.1} parent=1 // pred_fallthru
      _
    // Predicated region
    $region6: #{tpu_custom_call.1} parent=1 // pred_check
      _
    $region7: #{tpu_custom_call.1} parent=1 // pred_check_branch
      %20 = sbr.rel (0) target = $region9
    $region8: #{tpu_custom_call.1} parent=1 // pred_region
      %22 = dma.done [#allocation3], 256
    $region9: #{tpu_custom_call.1} parent=1 // pred_fallthru
      _
    %v23 = vld [vmem:[#allocation2] sm:$0xff]
    %v24 = vld [vmem:[#allocation2 + $0x8] sm:$0xff]
    %v25 = vmin.f32 %v23, 20.0
    %v26 = vmin.f32 %v24, 20.0
    %v27 = vmul.f32 %v25, 1.442695
    %v28 = vpow.pop %v27
    %v29 = vmul.f32 %v26, 1.442695
    %v30 = vpow.pop %v29
    %v31 = vadd.f32 %v28, 2.0
    %v32 = vadd.f32 %v30, 2.0
    %v33 = vmul.f32 %v28, %v31
    %v34 = vmul.f32 %v30, %v32
    %v35 = vadd.f32 %v33, 2.0
    %v36 = vadd.f32 %v34, 2.0
    %v37 = vrcp.pop %v35
    %v38 = vrcp.pop %v36
    %v39 = vmul.f32 %v35, %v37
    %v40 = vmul.f32 %v36, %v38
    %v41 = vsub.f32 2.0, %v39
    %v42 = vsub.f32 2.0, %v40
    %v43 = vmul.f32 %v37, %v41
    %v44 = vmul.f32 %v38, %v42
    %v45 = vmul.f32 %v35, %v43
    %v46 = vmul.f32 %v36, %v44
    %v47 = vsub.f32 2.0, %v45
    %v48 = vsub.f32 2.0, %v46
    %v49 = vmul.f32 %v43, %v47
    %v50 = vmul.f32 %v44, %v48
    %v51 = vmul.f32 %v23, %v33
    %v52 = vmul.f32 %v24, %v34
    %v53 = vmul.f32 %v51, %v49
    %v54 = vmul.f32 %v52, %v50
    %55 = vst [vmem:[#allocation5] sm:$0xff] %v53
    %56 = vst [vmem:[#allocation5 + $0x8] sm:$0xff] %v54
    // Predicated region
    $region10: #{tpu_custom_call.1} parent=1 // pred_check
      _
    $region11: #{tpu_custom_call.1} parent=1 // pred_check_branch
      %58 = sbr.rel (0) target = $region13
    $region12: #{tpu_custom_call.1} parent=1 // pred_region
      %60 = vsyncadd [#allocation4], 0
      %s62 = sshll.u32 [#allocation5], 4
      %s63 = int_to_ptr.vmem [resolvable:$true] %s62
      %s64 = sshll.u32 %s1, 4
      %s65 = int_to_ptr.hbm [resolvable:$true] %s64
      %67 = dma.vmem_to_hbm [thread:$0]  %s63, 256, %s65, [#allocation4]
    $region13: #{tpu_custom_call.1} parent=1 // pred_fallthru
      _
    // Predicated region
    $region14: #{tpu_custom_call.1} parent=1 // pred_check
      _
    $region15: #{tpu_custom_call.1} parent=1 // pred_check_branch
      %69 = sbr.rel (0) target = $region17
    $region16: #{tpu_custom_call.1} parent=1 // pred_region
      %71 = dma.done [#allocation4], 256
    $region17: #{tpu_custom_call.1} parent=1 // pred_fallthru
      _
    %72 = vsyncpa [#allocation3], 1
    %73 = vsyncpa [#allocation4], 1

</llo_original>
